<compile_context>
chip_gen: v7x
topology: tpu7x:2x2x1
jax: 0.10.0
libtpu: 0.0.40
codegen_flags: <defaults>
</compile_context>

<pallas_src>
import jax
import jax.numpy as jnp
from jax import lax
from jax.experimental import pallas as pl
from jax.experimental.pallas import tpu as pltpu


_VMEM_BUDGET_BYTES = 40 * 1024 * 1024   # tile-selection budget (v7x-safe)
_VMEM_LIMIT_BYTES = 48 * 1024 * 1024    # < v7x's 64 MiB physical VMEM


def _pick_tile_n(ntoken, ninp, m, out_itemsize, tn_max):
    """Vocab tile size: a single full-extent block for small vocabs, else the
    largest 256-multiple (128 when tn_max < 256) <= tn_max whose
    double-buffered VMEM footprint fits the budget."""
    def vmem_bytes(t):
        return (2 * t * ninp * 2          # double-buffered bf16 W tile
                + 2 * m * t * out_itemsize  # double-buffered output tile
                + 2 * t * 4               # double-buffered f32 bias tile
                + 2 * m * ninp * 2)       # resident bf16 x (conservative 2x)

    if ntoken <= tn_max and vmem_bytes(ntoken) <= _VMEM_BUDGET_BYTES:
        return ntoken                     # single full-dim block (always legal)

    step = 128 if tn_max < 256 else 256   # 128-lane alignment is what matters
    t = max((min(tn_max, ntoken) // step) * step, step)
    while t > step and vmem_bytes(t) > _VMEM_BUDGET_BYTES:
        t -= step
    return t


def _decoder_kernel(x_ref, w_ref, b_ref, o_ref):
    # x_ref: (M, ninp)  bf16, resident across the vocab grid
    # w_ref: (TN, ninp) bf16 tile of W in its native nn.Linear layout
    # b_ref: (1, TN)    f32
    # o_ref: (M, TN)
    # Trans-B contraction: the MXU consumes it directly and W-tile DMAs stay
    # fully contiguous; no per-tile transpose is materialized.
    acc = lax.dot_general(
        x_ref[...],
        w_ref[...],
        dimension_numbers=(((1,), (1,)), ((), ())),   # contract ninp with ninp
        preferred_element_type=jnp.float32,
    )
    o_ref[...] = (acc + b_ref[...]).astype(o_ref.dtype)


def prepare_decoder_params(weight, bias):
    """ONE-TIME parameter prep (at model init, not per forward):
    bf16 weight (halves HBM bytes on this weight-bandwidth-bound kernel) and
    an f32 (1, ntoken) bias row."""
    w_bf16 = weight.astype(jnp.bfloat16)
    bias_row = bias.astype(jnp.float32).reshape(1, -1)
    return w_bf16, bias_row


def decoder_forward(inp, w_bf16, bias_row, *, tn_max=4096):
    """nn.Linear(ninp, ntoken) forward:  y = inp @ W.T + b

    inp:      (seq, batch, ninp)
    w_bf16:   (ntoken, ninp) bf16   — from prepare_decoder_params
    bias_row: (1, ntoken)    f32    — from prepare_decoder_params
    """
    seq, batch, ninp = inp.shape
    ntoken = w_bf16.shape[0]
    m = seq * batch
    out_dtype = inp.dtype
    out_itemsize = jnp.dtype(out_dtype).itemsize

    tile_n = _pick_tile_n(ntoken, ninp, m, out_itemsize, tn_max)
    # No vocab padding: Pallas pads the boundary-block read and masks the
    # out-of-range columns on write.
    grid = (pl.cdiv(ntoken, tile_n),)

    x_bf = inp.reshape(m, ninp).astype(jnp.bfloat16)

    cost = pl.CostEstimate(
        flops=2 * m * ninp * ntoken,
        transcendentals=0,
        bytes_accessed=(m * ninp * 2            # x (bf16)
                        + ntoken * ninp * 2     # W (bf16)
                        + ntoken * 4            # bias (f32)
                        + m * ntoken * out_itemsize),
    )

    out2d = pl.pallas_call(
        _decoder_kernel,
        out_shape=jax.ShapeDtypeStruct((m, ntoken), out_dtype),
        grid_spec=pltpu.PrefetchScalarGridSpec(
            num_scalar_prefetch=0,
            grid=grid,
            in_specs=[
                pl.BlockSpec((m, ninp), lambda j: (0, 0)),        # x resident
                pl.BlockSpec((tile_n, ninp), lambda j: (j, 0)),   # W tile stream
                pl.BlockSpec((1, tile_n), lambda j: (0, j)),      # bias tile
            ],
            out_specs=pl.BlockSpec((m, tile_n), lambda j: (0, j)),
        ),
        compiler_params=pltpu.CompilerParams(
            # "parallel": lets v7x's two TensorCores split the vocab axis;
            # harmless on single-TC v5e/v6e.
            dimension_semantics=("parallel",),
            vmem_limit_bytes=_VMEM_LIMIT_BYTES,
        ),
        cost_estimate=cost,
    )(x_bf, w_bf16, bias_row)

    return out2d.reshape(seq, batch, ntoken)


if __name__ == "__main__":
    # Small shapes consistent with the module's forward: (seq, batch, ninp).
    seq, batch, ninp, ntoken = 8, 2, 32, 64

    key = jax.random.PRNGKey(0)
    k_inp, k_w, k_w2 = jax.random.split(key, 3)

    inp = jax.random.normal(k_inp, (seq, batch, ninp), dtype=jnp.float32)

    # Deterministic parameter init mirroring Decoder.init_weights():
    initrange = 0.1
    weight = jax.random.uniform(
        k_w, (ntoken, ninp), dtype=jnp.float32,
        minval=-initrange, maxval=initrange)
    bias = jnp.zeros((ntoken,), dtype=jnp.float32)

    # One-time parameter prep (as at model init), then the forward pass.
    w_bf, b_row = prepare_decoder_params(weight, bias)
    out = jax.block_until_ready(decoder_forward(inp, w_bf, b_row))
    assert out.shape == (seq, batch, ntoken)

    # Tight check vs. a reference using the same bf16-cast operands
    # (only accumulation order differs).
    x_bf32 = inp.astype(jnp.bfloat16).astype(jnp.float32)
    w_bf32 = weight.astype(jnp.bfloat16).astype(jnp.float32)
    ref_bf = x_bf32 @ w_bf32.T + bias
    assert jnp.allclose(out, ref_bf, atol=1e-4, rtol=1e-4)

    # Loose check vs. the full-f32 nn.Linear reference (bf16 rounding only).
    ref_f32 = inp @ weight.T + bias
    assert jnp.allclose(out, ref_f32, atol=5e-2, rtol=5e-2)

    # Exercise the multi-tile + masked-boundary-block path: ntoken=300 with
    # tn_max=128 -> tile 128, grid of cdiv(300,128)=3, last block write-masked
    # (no padding, no output slice).
    ntoken2 = 300
    weight2 = jax.random.uniform(
        k_w2, (ntoken2, ninp), dtype=jnp.float32,
        minval=-initrange, maxval=initrange)
    bias2 = jnp.zeros((ntoken2,), dtype=jnp.float32)
    w_bf2, b_row2 = prepare_decoder_params(weight2, bias2)
    out2 = jax.block_until_ready(
        decoder_forward(inp, w_bf2, b_row2, tn_max=128))
    assert out2.shape == (seq, batch, ntoken2)
    ref2 = (inp.astype(jnp.bfloat16).astype(jnp.float32)
            @ weight2.astype(jnp.bfloat16).astype(jnp.float32).T) + bias2
    assert jnp.allclose(out2, ref2, atol=1e-4, rtol=1e-4)

    print("KERNEL_OK")
</pallas_src>

<mosaic_0001>
module attributes {stable_mosaic.version = 11 : i64} {
  func.func @_decoder_kernel(%arg0: i32, %arg1: memref<16x32xbf16, #tpu.memory_space<vmem>>, %arg2: memref<64x32xbf16, #tpu.memory_space<vmem>>, %arg3: memref<1x64xf32, #tpu.memory_space<vmem>>, %arg4: memref<16x64xf32, #tpu.memory_space<vmem>>) attributes {dimension_semantics = [#tpu.dimension_semantics<parallel>], iteration_bounds = array<i64: 1>, scalar_prefetch = 0 : i64, scratch_operands = 0 : i64, tpu.core_type = #tpu.core_type<tc>, window_params = [{pipeline_mode = #tpu.pipeline_mode<synchronous>, transform_indices = @transform_0, window_bounds = array<i64: 16, 32>}, {transform_indices = @transform_1, window_bounds = array<i64: 64, 32>}, {transform_indices = @transform_2, window_bounds = array<i64: 1, 64>}, {transform_indices = @transform_3, window_bounds = array<i64: 16, 64>}]} {
    %c0 = arith.constant 0 : index
    %c0_0 = arith.constant 0 : index
    %0 = vector.load %arg1[%c0, %c0_0] : memref<16x32xbf16, #tpu.memory_space<vmem>>, vector<16x32xbf16>
    %c0_1 = arith.constant 0 : index
    %c0_2 = arith.constant 0 : index
    %1 = vector.load %arg2[%c0_1, %c0_2] : memref<64x32xbf16, #tpu.memory_space<vmem>>, vector<64x32xbf16>
    %cst = arith.constant dense<0.000000e+00> : vector<16x64xf32>
    %2 = tpu.matmul %0, %1, %cst {dimension_numbers = #tpu.dot_dimension_numbers<[1], [1], [0], [0], [0, 0, 1, 0], [], []>} : vector<16x32xbf16>, vector<64x32xbf16>, vector<16x64xf32> -> vector<16x64xf32>
    %c0_3 = arith.constant 0 : index
    %c0_4 = arith.constant 0 : index
    %3 = vector.load %arg3[%c0_3, %c0_4] : memref<1x64xf32, #tpu.memory_space<vmem>>, vector<1x64xf32>
    %4 = vector.broadcast %3 : vector<1x64xf32> to vector<16x64xf32>
    %5 = arith.addf %2, %4 : vector<16x64xf32>
    %c0_5 = arith.constant 0 : index
    %c0_6 = arith.constant 0 : index
    %6 = vector.load %arg4[%c0_5, %c0_6] : memref<16x64xf32, #tpu.memory_space<vmem>>, vector<16x64xf32>
    tpu.vector_store %arg4[%c0_5, %c0_6], %5 {strides = array<i32>} : memref<16x64xf32, #tpu.memory_space<vmem>>, vector<16x64xf32>,
    return
  }
  func.func @transform_0(%arg0: i32) -> (i32, i32) {
    %c0_i32 = arith.constant 0 : i32
    %c0_i32_0 = arith.constant 0 : i32
    %c0_i32_1 = arith.constant 0 : i32
    return %c0_i32, %c0_i32_0 : i32, i32
  }
  func.func @transform_1(%arg0: i32) -> (i32, i32) {
    %c0_i32 = arith.constant 0 : i32
    %c0_i32_0 = arith.constant 0 : i32
    return %arg0, %c0_i32 : i32, i32
  }
  func.func @transform_2(%arg0: i32) -> (i32, i32) {
    %c0_i32 = arith.constant 0 : i32
    %c0_i32_0 = arith.constant 0 : i32
    return %c0_i32, %arg0 : i32, i32
  }
  func.func @transform_3(%arg0: i32) -> (i32, i32) {
    %c0_i32 = arith.constant 0 : i32
    %c0_i32_0 = arith.constant 0 : i32
    return %c0_i32, %arg0 : i32, i32
  }
}

</mosaic_0001>

<llo_original>
// kernel: tpu_custom_call.1
$region0: #{tpu_custom_call.1}
  #allocation0 [shape = 'u32[]', space=smem, size = 0x4, offset = 0x4, fixed_abs, tag = 'smem constant byte address 0x4 - core index']
  #allocation1 [shape = 'u32[144,128]{1,0:T(1,128)}', space=vmem, size = 0x12000, scoped, tag = 'internal scratch']
  %s0 = inlined_call_operand.vmem [shape: bf16[16,32], index: 0, kind: input, shape index: {}]
  %s1 = inlined_call_operand.vmem [shape: bf16[64,32], index: 1, kind: input, shape index: {}]
  %s2 = inlined_call_operand.vmem [shape: f32[1,64], index: 2, kind: input, shape index: {}]
  %s3 = inlined_call_operand.hbm [shape: f32[16,64], index: 3, kind: output, shape index: {}]
  %s4 = sld [smem:[#allocation0]]
  $region22: #{tpu_custom_call.1} parent=0
    _
  %s6 = ssub.s32 1, %s4
  %s7 = scalar_select 0, %s6, %s4
  $region1: #{tpu_custom_call.1} parent=0
    #allocation2 [shape = 'u8[8192]{0}', space=vmem, size = 0x2000, scoped, tag = 'output window, operand 0, single buffered']
    #allocation3 [shape = 's32[1]{0}', space=sflag, size = 0x4, scoped, tag = 'scoped memory for tpu_custom_call.1']
    %8 = vsyncpa [#allocation3], 0
    // Predicated region
    $region2: #{tpu_custom_call.1} parent=1 // pred_check
      _
    $region3: #{tpu_custom_call.1} parent=1 // pred_check_branch
      %10 = sbr.rel (0) target = $region5
    $region4: #{tpu_custom_call.1} parent=1 // pred_region
      _
    $region5: #{tpu_custom_call.1} parent=1 // pred_fallthru
      _
    // Predicated region
    $region6: #{tpu_custom_call.1} parent=1 // pred_check
      _
    $region7: #{tpu_custom_call.1} parent=1 // pred_check_branch
      %12 = sbr.rel (0) target = $region9
    $region8: #{tpu_custom_call.1} parent=1 // pred_region
      _
    $region9: #{tpu_custom_call.1} parent=1 // pred_fallthru
      _
    // Predicated region
    $region10: #{tpu_custom_call.1} parent=1 // pred_check
      _
    $region11: #{tpu_custom_call.1} parent=1 // pred_check_branch
      %14 = sbr.rel (0) target = $region13
    $region12: #{tpu_custom_call.1} parent=1 // pred_region
      _
    $region13: #{tpu_custom_call.1} parent=1 // pred_fallthru
      _
    %v16 = vld [vmem:[%s0] sm:$0xf]
    %v17 = vld [vmem:[%s0 + $0x4] sm:$0xf]
    %v18 = vld [vmem:[%s1] sm:$0xf]
    %v19 = vld [vmem:[%s1 + $0x4] sm:$0xf]
    %v20 = vld [vmem:[%s1 + $0x8] sm:$0xf]
    %v21 = vld [vmem:[%s1 + $0xc] sm:$0xf]
    %v22 = vld [vmem:[%s1 + $0x10] sm:$0xf]
    %v23 = vld [vmem:[%s1 + $0x14] sm:$0xf]
    %v24 = vld [vmem:[%s1 + $0x18] sm:$0xf]
    %v25 = vld [vmem:[%s1 + $0x1c] sm:$0xf]
    %v26 = vld [vmem:[%s2] sm:$0x1]
    %v28 = vlaneseq
    %v29 = vshrl.u32 %v28, 7
    %v30 = vsub.s32 0, %v29
    %v31 = vrot.slane %v26, %v30
    %v35 = vunpack.c.l.b16 %v16
    %v36 = vunpack.c.l.b16 %v17
    %v37 = vpack.c.b16 %v36, %v35
    %v46 = vunpack.c.l.b16 %v18
    %v47 = vunpack.c.l.b16 %v19
    %v48 = vunpack.c.l.b16 %v20
    %v49 = vunpack.c.l.b16 %v21
    %v50 = vunpack.c.l.b16 %v22
    %v51 = vunpack.c.l.b16 %v23
    %v52 = vunpack.c.l.b16 %v24
    %v53 = vunpack.c.l.b16 %v25
    %v54 = vpack.c.b16 %v47, %v46
    %v55 = vpack.c.b16 %v49, %v48
    %v56 = vpack.c.b16 %v51, %v50
    %v57 = vpack.c.b16 %v53, %v52
    %vm58 = vcmask 261120
    %v60 = vsel %vm58, %v37, 0
    %v63 = vsel %vm58, %v54, 0
    %v66 = vsel %vm58, %v55, 0
    %v69 = vsel %vm58, %v56, 0
    %v72 = vsel %vm58, %v57, 0
    %74 = vmatprep.subr.bf16.mxu0 0
    %75 = vmatpush1.bf16.xpose.msra.mxu0 %v63
    %76 = vmatprep.subr.bf16.mxu0 0
    %77 = vmatpush1.bf16.xpose.msra.mxu0 %v66
    %78 = vmatprep.subr.bf16.mxu0 0
    %79 = vmatpush1.bf16.xpose.msra.mxu0 %v69
    %80 = vmatprep.subr.bf16.mxu0 0
    %81 = vmatpush1.bf16.xpose.msra.mxu0 %v72
    %82 = vmatprep.subr.bf16.mxu0 0
    %83 = vmatpush1.bf16.xpose.msra.mxu0 0
    %84 = vmatprep.subr.bf16.mxu0 0
    %85 = vmatpush1.bf16.xpose.msra.mxu0 0
    %86 = vmatprep.subr.bf16.mxu0 0
    %87 = vmatpush1.bf16.xpose.msra.mxu0 0
    %88 = vmatprep.subr.bf16.mxu0 0
    %89 = vmatpush1.bf16.xpose.msra.mxu0 0
    %90 = vmatprep.subr.bf16.mxu0 0
    %91 = vmatpush1.bf16.xpose.msra.mxu0 0
    %92 = vmatprep.subr.bf16.mxu0 0
    %93 = vmatpush1.bf16.xpose.msra.mxu0 0
    %94 = vmatprep.subr.bf16.mxu0 0
    %95 = vmatpush1.bf16.xpose.msra.mxu0 0
    %96 = vmatprep.subr.bf16.mxu0 0
    %97 = vmatpush1.bf16.xpose.msra.mxu0 0
    %98 = vmatprep.subr.bf16.mxu0 0
    %99 = vmatpush1.bf16.xpose.msra.mxu0 0
    %100 = vmatprep.subr.bf16.mxu0 0
    %101 = vmatpush1.bf16.xpose.msra.mxu0 0
    %102 = vmatprep.subr.bf16.mxu0 0
    %103 = vmatpush1.bf16.xpose.msra.mxu0 0
    %104 = vmatprep.subr.bf16.mxu0 0
    %105 = vmatpush1.bf16.xpose.msra.mxu0 0
    %106 = vmatprep.mubr.bf16.mxu0 0
    %107 = vmatmul.mubr.bf16.gmra.mrb[0].mxu0 %v60
    %v108 = vpop.f32.mrb[0].mxu0
    %v109 = vadd.f32 %v31, %v108
    %v110 = vpop.f32.mrb[0].mxu0
    %v111 = vpop.f32.mrb[0].mxu0
    %v112 = vadd.f32 %v31, %v111
    %v113 = vpop.f32.mrb[0].mxu0
    %114 = vdwg.mxu0
    %vm115 = vcmask 523264
    %116 = vst.msk [vmem:[#allocation2] sm:$0xff] %vm115, %v109
    %117 = vst.msk [vmem:[#allocation2 + $0x8] sm:$0xff] %vm115, %v112
    // Predicated region
    $region14: #{tpu_custom_call.1} parent=1 // pred_check
      _
    $region15: #{tpu_custom_call.1} parent=1 // pred_check_branch
      %119 = sbr.rel (0) target = $region17
    $region16: #{tpu_custom_call.1} parent=1 // pred_region
      %s121 = ssub.s32 256, 256
      %122 = vsyncadd [#allocation3], %s121
      %s123 = sshll.u32 [#allocation2], 4
      %s124 = int_to_ptr.vmem [resolvable:$true] %s123
      %129 = dma.vmem_to_hbm [thread:$0]  %s124, 256, %s3, [#allocation3], 128, 128, 8
    $region17: #{tpu_custom_call.1} parent=1 // pred_fallthru
      _
    // Predicated region
    $region18: #{tpu_custom_call.1} parent=1 // pred_check
      _
    $region19: #{tpu_custom_call.1} parent=1 // pred_check_branch
      %131 = sbr.rel (0) target = $region21
    $region20: #{tpu_custom_call.1} parent=1 // pred_region
      %132 = dma.done [#allocation3], 256
    $region21: #{tpu_custom_call.1} parent=1 // pred_fallthru
      _
    %133 = vsyncpa [#allocation3], 1

</llo_original>
